<compile_context>
chip_gen: v6e
topology: v6e:2x2x1
jax: 0.10.0
libtpu: 0.0.40
codegen_flags: <defaults>
</compile_context>

<pallas_src>
import functools
import math

import jax
import jax.numpy as jnp
from jax import lax
from jax.experimental import pallas as pl
from jax.experimental.pallas import tpu as pltpu


# ------------------------------ tiling helper ------------------------------- #
def _pick_tile(dim, target):
    """Largest divisor of `dim` that is <= target, preferring 128/8 alignment."""
    if dim <= target:
        return dim
    for align in (128, 8, 1):
        t = (target // align) * align
        while t >= align:
            if dim % t == 0:
                return t
            t -= align
    return dim


# --------------------------- tiled linear kernel ----------------------------- #
def _matmul_bias_kernel(x_ref, w_ref, b_ref, o_ref, acc_ref):
    # x_ref: (tm, tk), w_ref: (tk, tn) [pre-transposed], b_ref: (1, tn)
    k = pl.program_id(2)

    @pl.when(k == 0)
    def _():
        acc_ref[...] = jnp.zeros(acc_ref.shape, acc_ref.dtype)

    acc_ref[...] += jnp.dot(x_ref[...], w_ref[...],
                            preferred_element_type=jnp.float32)

    @pl.when(k == pl.num_programs(2) - 1)
    def _():
        y = acc_ref[...] + b_ref[...].astype(jnp.float32)
        o_ref[...] = y.astype(o_ref.dtype)


def pallas_linear(x2d, w_t, b, *, tm_target=256, tn_target=256, tk_target=512):
    """y = x2d @ w_t + b, with w_t already (K, N) (i.e. nn.Linear weight.T)."""
    M, K = x2d.shape
    K2, N = w_t.shape
    assert K == K2
    tm = _pick_tile(M, tm_target)
    tn = _pick_tile(N, tn_target)
    tk = _pick_tile(K, tk_target)
    b2d = b.reshape(1, N)

    itemsize = jnp.dtype(x2d.dtype).itemsize
    cost = pl.CostEstimate(
        flops=2 * M * N * K,
        transcendentals=0,
        bytes_accessed=itemsize * (M * K + K * N + M * N + N),
    )

    return pl.pallas_call(
        _matmul_bias_kernel,
        out_shape=jax.ShapeDtypeStruct((M, N), x2d.dtype),
        grid_spec=pltpu.PrefetchScalarGridSpec(
            num_scalar_prefetch=0,
            grid=(M // tm, N // tn, K // tk),
            in_specs=[
                pl.BlockSpec((tm, tk), lambda i, j, k: (i, k)),
                pl.BlockSpec((tk, tn), lambda i, j, k: (k, j)),
                pl.BlockSpec((1, tn), lambda i, j, k: (0, j)),
            ],
            out_specs=pl.BlockSpec((tm, tn), lambda i, j, k: (i, j)),
            scratch_shapes=[pltpu.VMEM((tm, tn), jnp.float32)],
        ),
        compiler_params=pltpu.CompilerParams(
            dimension_semantics=("parallel", "parallel", "arbitrary")),
        cost_estimate=cost,
    )(x2d, w_t, b2d)


# ------------------------ flash-style attention kernel ----------------------- #
def _flash_attn_kernel(q_ref, k_ref, v_ref, o_ref, m_ref, l_ref, acc_ref, *, scale):
    # q_ref: (tq, D), k_ref/v_ref: (tkv, D), o_ref: (tq, D)
    # scratch: m_ref/l_ref: (tq, 1) f32, acc_ref: (tq, D) f32
    ki = pl.program_id(3)

    @pl.when(ki == 0)
    def _():
        m_ref[...] = jnp.full(m_ref.shape, -jnp.inf, m_ref.dtype)
        l_ref[...] = jnp.zeros(l_ref.shape, l_ref.dtype)
        acc_ref[...] = jnp.zeros(acc_ref.shape, acc_ref.dtype)

    q = q_ref[...]
    # fold 1/sqrt(D) into q (tq*D multiplies instead of tq*tkv on the scores)
    qs = q * jnp.asarray(scale, dtype=q.dtype)
    k = k_ref[...]
    v = v_ref[...]

    # scores (tq, tkv): native dtype into the MXU, f32 accumulation
    s = lax.dot_general(qs, k, (((1,), (1,)), ((), ())),
                        preferred_element_type=jnp.float32)

    m_prev = m_ref[...]
    m_new = jnp.maximum(m_prev, jnp.max(s, axis=-1, keepdims=True))
    alpha = jnp.exp(m_prev - m_new)
    p = jnp.exp(s - m_new)

    l_ref[...] = alpha * l_ref[...] + jnp.sum(p, axis=-1, keepdims=True)
    acc_ref[...] = alpha * acc_ref[...] + jnp.dot(
        p.astype(v.dtype), v, preferred_element_type=jnp.float32)
    m_ref[...] = m_new

    @pl.when(ki == pl.num_programs(3) - 1)
    def _():
        inv = pl.reciprocal(l_ref[...], approx=True)
        o_ref[...] = (acc_ref[...] * inv).astype(o_ref.dtype)


def pallas_flash_attention(q, k, v, *, tq_target=512, tkv_target=512):
    """
    q: (B, G, Mq, D) where Mq = q_heads_per_group * S (rows are independent)
    k, v: (B, G, S, D)
    returns: (B, G, Mq, D)
    """
    B, G, Mq, D = q.shape
    S = k.shape[2]
    tq = _pick_tile(Mq, tq_target)
    tkv = _pick_tile(S, tkv_target)
    scale = 1.0 / math.sqrt(D)

    itemsize = jnp.dtype(q.dtype).itemsize
    cost = pl.CostEstimate(
        flops=4 * B * G * Mq * S * D,          # QK^T + PV
        transcendentals=B * G * Mq * S,        # exp
        bytes_accessed=itemsize * (2 * B * G * Mq * D + 2 * B * G * S * D),
    )

    kernel = functools.partial(_flash_attn_kernel, scale=scale)

    return pl.pallas_call(
        kernel,
        out_shape=jax.ShapeDtypeStruct((B, G, Mq, D), q.dtype),
        grid_spec=pltpu.PrefetchScalarGridSpec(
            num_scalar_prefetch=0,
            grid=(B, G, Mq // tq, S // tkv),
            in_specs=[
                pl.BlockSpec((None, None, tq, D),
                             lambda b, g, qi, ki: (b, g, qi, 0)),
                pl.BlockSpec((None, None, tkv, D),
                             lambda b, g, qi, ki: (b, g, ki, 0)),
                pl.BlockSpec((None, None, tkv, D),
                             lambda b, g, qi, ki: (b, g, ki, 0)),
            ],
            out_specs=pl.BlockSpec((None, None, tq, D),
                                   lambda b, g, qi, ki: (b, g, qi, 0)),
            scratch_shapes=[
                pltpu.VMEM((tq, 1), jnp.float32),   # running max
                pltpu.VMEM((tq, 1), jnp.float32),   # running denom
                pltpu.VMEM((tq, D), jnp.float32),   # output accumulator
            ],
        ),
        compiler_params=pltpu.CompilerParams(
            dimension_semantics=("parallel", "parallel", "parallel", "arbitrary")),
        cost_estimate=cost,
    )(q, k, v)


# ------------------------------ full forward --------------------------------- #
def prepare_params(params):
    """One-time weight prep: fuse QKV and pre-transpose to (K, N)."""
    w_qkv_t = jnp.concatenate(
        [params["wq"].T, params["wk"].T, params["wv"].T], axis=1)
    b_qkv = jnp.concatenate([params["bq"], params["bk"], params["bv"]])
    return dict(w_qkv_t=w_qkv_t, b_qkv=b_qkv,
                w_o_t=params["wo"].T, b_o=params["bo"])


def gqa_forward(x, fused, nums_head, nums_kv_head):
    """Reproduces GroupQueryAttention.forward(x, attention_mask=None), eval mode."""
    B, S, hidden = x.shape
    D = hidden // nums_head
    G = nums_kv_head
    gq = nums_head // G
    kv_dim = G * D

    x2d = x.reshape(B * S, hidden)

    # Fused Q/K/V projection: x streamed once.
    qkv = pallas_linear(x2d, fused["w_qkv_t"], fused["b_qkv"])   # (B*S, hidden+2*kv)
    Q = qkv[:, :hidden]
    K = qkv[:, hidden:hidden + kv_dim]
    V = qkv[:, hidden + kv_dim:]

    # Layout plumbing (XLA): head split + collapse (gq, S) -> Mq rows per group.
    q = Q.reshape(B, S, nums_head, D).transpose(0, 2, 1, 3)      # (B, H, S, D)
    q = q.reshape(B, G, gq * S, D)                               # (B, G, Mq, D)
    k = K.reshape(B, S, G, D).transpose(0, 2, 1, 3)              # (B, G, S, D)
    v = V.reshape(B, S, G, D).transpose(0, 2, 1, 3)

    attn = pallas_flash_attention(q, k, v)                       # (B, G, Mq, D)

    out = attn.reshape(B, nums_head, S, D).transpose(0, 2, 1, 3)
    out = out.reshape(B * S, hidden)

    y = pallas_linear(out, fused["w_o_t"], fused["b_o"])
    return y.reshape(B, S, hidden)


# ---------------------------- pure-JAX reference ------------------------------ #
def gqa_reference(x, params, nums_head, nums_kv_head):
    B, S, hidden = x.shape
    head_dim = hidden // nums_head
    gq = nums_head // nums_kv_head

    Q = x @ params["wq"].T + params["bq"]
    K = x @ params["wk"].T + params["bk"]
    V = x @ params["wv"].T + params["bv"]

    q = Q.reshape(B, S, nums_head, head_dim).transpose(0, 2, 1, 3)
    q = q.reshape(B, nums_kv_head, gq, S, head_dim)
    k = K.reshape(B, S, nums_kv_head, head_dim).transpose(0, 2, 1, 3)[:, :, None]
    v = V.reshape(B, S, nums_kv_head, head_dim).transpose(0, 2, 1, 3)[:, :, None]

    scores = jnp.matmul(q, jnp.swapaxes(k, -1, -2)) / math.sqrt(head_dim)
    weights = jax.nn.softmax(scores, axis=-1)
    out = jnp.matmul(weights, v)
    out = out.reshape(B, nums_head, S, head_dim).transpose(0, 2, 1, 3)
    out = out.reshape(B, S, hidden)
    return out @ params["wo"].T + params["bo"]


# ----------------------------------- main ------------------------------------- #
def init_params(key, hidden_dim, nums_head, nums_kv_head, dtype=jnp.float32):
    head_dim = hidden_dim // nums_head
    kv_dim = nums_kv_head * head_dim
    keys = jax.random.split(key, 8)

    def lin_init(kw, kb, out_f, in_f):
        bound = 1.0 / math.sqrt(in_f)
        w = jax.random.uniform(kw, (out_f, in_f), dtype, -bound, bound)
        b = jax.random.uniform(kb, (out_f,), dtype, -bound, bound)
        return w, b

    wq, bq = lin_init(keys[0], keys[1], hidden_dim, hidden_dim)
    wk, bk = lin_init(keys[2], keys[3], kv_dim, hidden_dim)
    wv, bv = lin_init(keys[4], keys[5], kv_dim, hidden_dim)
    wo, bo = lin_init(keys[6], keys[7], hidden_dim, hidden_dim)
    return dict(wq=wq, bq=bq, wk=wk, bk=bk, wv=wv, bv=bv, wo=wo, bo=bo)


if __name__ == "__main__":
    # Small deterministic config: hidden=32, H=4 query heads, G=2 kv heads
    # (head_dim=8, q_heads_per_group=2), batch=2, seq=8.
    batch, seq, hidden = 2, 8, 32
    nums_head, nums_kv_head = 4, 2

    root = jax.random.PRNGKey(0)
    kx, kp = jax.random.split(root)
    x = jax.random.normal(kx, (batch, seq, hidden), dtype=jnp.float32)
    params = init_params(kp, hidden, nums_head, nums_kv_head)
    fused = prepare_params(params)

    out = gqa_forward(x, fused, nums_head, nums_kv_head)
    out = jax.block_until_ready(out)

    ref = gqa_reference(x, params, nums_head, nums_kv_head)
    assert out.shape == (batch, seq, hidden)
    # Tolerance accounts for the EUP approximate reciprocal used in the
    # softmax normalization (pl.reciprocal(..., approx=True)).
    assert jnp.allclose(out, ref, atol=1e-2, rtol=1e-2), \
        "Pallas output mismatch vs reference"

    print("KERNEL_OK")
</pallas_src>

<mosaic_0001>
module attributes {stable_mosaic.version = 11 : i64} {
  func.func @_matmul_bias_kernel(%arg0: i32, %arg1: i32, %arg2: i32, %arg3: memref<16x32xf32, #tpu.memory_space<vmem>>, %arg4: memref<32x64xf32, #tpu.memory_space<vmem>>, %arg5: memref<1x64xf32, #tpu.memory_space<vmem>>, %arg6: memref<16x64xf32, #tpu.memory_space<vmem>>, %arg7: memref<16x64xf32, #tpu.memory_space<vmem>>) attributes {dimension_semantics = [#tpu.dimension_semantics<parallel>, #tpu.dimension_semantics<parallel>, #tpu.dimension_semantics<arbitrary>], iteration_bounds = array<i64: 1, 1, 1>, scalar_prefetch = 0 : i64, scratch_operands = 1 : i64, tpu.core_type = #tpu.core_type<tc>, window_params = [{transform_indices = @transform_0, window_bounds = array<i64: 16, 32>}, {transform_indices = @transform_1, window_bounds = array<i64: 32, 64>}, {transform_indices = @transform_2, window_bounds = array<i64: 1, 64>}, {transform_indices = @transform_3, window_bounds = array<i64: 16, 64>}]} {
    %c0_i32 = arith.constant 0 : i32
    %0 = arith.cmpi eq, %arg2, %c0_i32 : i32
    %1 = arith.extui %0 : i1 to i32
    %c0_i32_0 = arith.constant 0 : i32
    %2 = arith.cmpi ne, %1, %c0_i32_0 : i32
    scf.if %2 {
      %cst_10 = arith.constant 0.000000e+00 : f32
      %12 = vector.broadcast %cst_10 : f32 to vector<16x64xf32>
      %c0_11 = arith.constant 0 : index
      %c0_12 = arith.constant 0 : index
      %13 = vector.load %arg7[%c0_11, %c0_12] : memref<16x64xf32, #tpu.memory_space<vmem>>, vector<16x64xf32>
      tpu.vector_store %arg7[%c0_11, %c0_12], %12 {strides = array<i32>} : memref<16x64xf32, #tpu.memory_space<vmem>>, vector<16x64xf32>,
    } else {
    }
    %c0 = arith.constant 0 : index
    %c0_1 = arith.constant 0 : index
    %3 = vector.load %arg7[%c0, %c0_1] : memref<16x64xf32, #tpu.memory_space<vmem>>, vector<16x64xf32>
    %c0_2 = arith.constant 0 : index
    %c0_3 = arith.constant 0 : index
    %4 = vector.load %arg3[%c0_2, %c0_3] : memref<16x32xf32, #tpu.memory_space<vmem>>, vector<16x32xf32>
    %c0_4 = arith.constant 0 : index
    %c0_5 = arith.constant 0 : index
    %5 = vector.load %arg4[%c0_4, %c0_5] : memref<32x64xf32, #tpu.memory_space<vmem>>, vector<32x64xf32>
    %cst = arith.constant dense<0.000000e+00> : vector<16x64xf32>
    %6 = tpu.matmul %4, %5, %cst {dimension_numbers = #tpu.dot_dimension_numbers<[1], [0], [0], [1], [0, 0, 1, 1], [], []>} : vector<16x32xf32>, vector<32x64xf32>, vector<16x64xf32> -> vector<16x64xf32>
    %7 = arith.addf %3, %6 : vector<16x64xf32>
    %c0_6 = arith.constant 0 : index
    %c0_7 = arith.constant 0 : index
    %8 = vector.load %arg7[%c0_6, %c0_7] : memref<16x64xf32, #tpu.memory_space<vmem>>, vector<16x64xf32>
    tpu.vector_store %arg7[%c0_6, %c0_7], %7 {strides = array<i32>} : memref<16x64xf32, #tpu.memory_space<vmem>>, vector<16x64xf32>,
    %c0_i32_8 = arith.constant 0 : i32
    %9 = arith.cmpi eq, %arg2, %c0_i32_8 : i32
    %10 = arith.extui %9 : i1 to i32
    %c0_i32_9 = arith.constant 0 : i32
    %11 = arith.cmpi ne, %10, %c0_i32_9 : i32
    scf.if %11 {
      %c0_10 = arith.constant 0 : index
      %c0_11 = arith.constant 0 : index
      %12 = vector.load %arg7[%c0_10, %c0_11] : memref<16x64xf32, #tpu.memory_space<vmem>>, vector<16x64xf32>
      %c0_12 = arith.constant 0 : index
      %c0_13 = arith.constant 0 : index
      %13 = vector.load %arg5[%c0_12, %c0_13] : memref<1x64xf32, #tpu.memory_space<vmem>>, vector<1x64xf32>
      %14 = vector.broadcast %13 : vector<1x64xf32> to vector<16x64xf32>
      %15 = arith.addf %12, %14 : vector<16x64xf32>
      %c0_14 = arith.constant 0 : index
      %c0_15 = arith.constant 0 : index
      %16 = vector.load %arg6[%c0_14, %c0_15] : memref<16x64xf32, #tpu.memory_space<vmem>>, vector<16x64xf32>
      tpu.vector_store %arg6[%c0_14, %c0_15], %15 {strides = array<i32>} : memref<16x64xf32, #tpu.memory_space<vmem>>, vector<16x64xf32>,
    } else {
    }
    return
  }
  func.func @transform_0(%arg0: i32, %arg1: i32, %arg2: i32) -> (i32, i32) {
    %c0_i32 = arith.constant 0 : i32
    return %arg0, %arg2 : i32, i32
  }
  func.func @transform_1(%arg0: i32, %arg1: i32, %arg2: i32) -> (i32, i32) {
    %c0_i32 = arith.constant 0 : i32
    return %arg2, %arg1 : i32, i32
  }
  func.func @transform_2(%arg0: i32, %arg1: i32, %arg2: i32) -> (i32, i32) {
    %c0_i32 = arith.constant 0 : i32
    %c0_i32_0 = arith.constant 0 : i32
    return %c0_i32, %arg1 : i32, i32
  }
  func.func @transform_3(%arg0: i32, %arg1: i32, %arg2: i32) -> (i32, i32) {
    %c0_i32 = arith.constant 0 : i32
    return %arg0, %arg1 : i32, i32
  }
}

</mosaic_0001>

<llo_original>
// kernel: tpu_custom_call.1
$region0: #{tpu_custom_call.1}
  #allocation0 [shape = 'u32[]', space=smem, size = 0x4, offset = 0x4, fixed_abs, tag = 'smem constant byte address 0x4 - core index']
  #allocation1 [shape = 'u32[144,128]{1,0:T(1,128)}', space=vmem, size = 0x12000, scoped, tag = 'internal scratch']
  #allocation2 [shape = 'f32[16,64]{1,0:T(8,128)}', space=vmem, size = 0x2000, scoped, tag = 'scratch operand']
  %s0 = inlined_call_operand.hbm [shape: f32[16,32], index: 0, kind: input, shape index: {}]
  %s1 = inlined_call_operand.hbm [shape: f32[32,64], index: 1, kind: input, shape index: {}]
  %s2 = inlined_call_operand.vmem [shape: f32[1,64], index: 2, kind: input, shape index: {}]
  %s3 = inlined_call_operand.hbm [shape: f32[16,64], index: 3, kind: output, shape index: {}]
  %s4 = sld [smem:[#allocation0]]
  $region38: #{tpu_custom_call.1} parent=0
    _
  %s6 = ssub.s32 1, %s4
  %s7 = scalar_select 0, %s6, %s4
  $region1: #{tpu_custom_call.1} parent=0
    #allocation3 [shape = 'u8[8192]{0}', space=vmem, size = 0x2000, scoped, tag = 'input window, operand 0, single buffered']
    #allocation4 [shape = 's32[1]{0}', space=sflag, size = 0x4, scoped, tag = 'scoped memory for tpu_custom_call.1']
    #allocation5 [shape = 's32[1]{0}', space=sflag, size = 0x4, scoped, tag = 'scoped memory for tpu_custom_call.1']
    #allocation6 [shape = 'u8[16384]{0}', space=vmem, size = 0x4000, scoped, tag = 'input window, operand 1, single buffered']
    #allocation7 [shape = 's32[1]{0}', space=sflag, size = 0x4, scoped, tag = 'scoped memory for tpu_custom_call.1']
    #allocation8 [shape = 'u8[8192]{0}', space=vmem, size = 0x2000, scoped, tag = 'output window, operand 0, single buffered']
    %8 = vsyncpa [#allocation4], 0
    %9 = vsyncpa [#allocation7], 0
    %10 = vsyncpa [#allocation5], 0
    // Predicated region
    $region2: #{tpu_custom_call.1} parent=1 // pred_check
      _
    $region3: #{tpu_custom_call.1} parent=1 // pred_check_branch
      %12 = sbr.rel (0) target = $region5
    $region4: #{tpu_custom_call.1} parent=1 // pred_region
      %s14 = ssub.s32 256, 256
      %15 = vsyncadd [#allocation4], %s14
      %s16 = sshll.u32 [#allocation3], 4
      %s17 = int_to_ptr.vmem [resolvable:$true] %s16
      %22 = dma.hbm_to_vmem [thread:$0]  %s0, 256, %s17, [#allocation4], 128, 128, 8
    $region5: #{tpu_custom_call.1} parent=1 // pred_fallthru
      _
    // Predicated region
    $region6: #{tpu_custom_call.1} parent=1 // pred_check
      _
    $region7: #{tpu_custom_call.1} parent=1 // pred_check_branch
      %24 = sbr.rel (0) target = $region9
    $region8: #{tpu_custom_call.1} parent=1 // pred_region
      %s26 = ssub.s32 512, 512
      %27 = vsyncadd [#allocation7], %s26
      %s28 = sshll.u32 [#allocation6], 4
      %s29 = int_to_ptr.vmem [resolvable:$true] %s28
      %34 = dma.hbm_to_vmem [thread:$0]  %s1, 512, %s29, [#allocation7], 128, 128, 8
    $region9: #{tpu_custom_call.1} parent=1 // pred_fallthru
      _
    // Predicated region
    $region10: #{tpu_custom_call.1} parent=1 // pred_check
      _
    $region11: #{tpu_custom_call.1} parent=1 // pred_check_branch
      %36 = sbr.rel (0) target = $region13
    $region12: #{tpu_custom_call.1} parent=1 // pred_region
      _
    $region13: #{tpu_custom_call.1} parent=1 // pred_fallthru
      _
    // Predicated region
    $region14: #{tpu_custom_call.1} parent=1 // pred_check
      _
    $region15: #{tpu_custom_call.1} parent=1 // pred_check_branch
      %38 = sbr.rel (0) target = $region17
    $region16: #{tpu_custom_call.1} parent=1 // pred_region
      %39 = dma.done [#allocation4], 256
    $region17: #{tpu_custom_call.1} parent=1 // pred_fallthru
      _
    // Predicated region
    $region18: #{tpu_custom_call.1} parent=1 // pred_check
      _
    $region19: #{tpu_custom_call.1} parent=1 // pred_check_branch
      %41 = sbr.rel (0) target = $region21
    $region20: #{tpu_custom_call.1} parent=1 // pred_region
      %42 = dma.done [#allocation7], 512
    $region21: #{tpu_custom_call.1} parent=1 // pred_fallthru
      _
    %p43 = scmp.eq.s32.totalorder 0, 0
    // Predicated region
    $region22: #{tpu_custom_call.1} parent=1 // pred_check
      %p44 = pneg %p43
    $region23: #{tpu_custom_call.1} parent=1 // pred_check_branch
      %46 = sbr.rel (%p44) target = $region25
    $region24: #{tpu_custom_call.1} parent=1 // pred_region
      %vm47 = vcmask 523264
      %48 = vst.msk [vmem:[#allocation2] sm:$0xff] %vm47, 0.0
      %49 = vst.msk [vmem:[#allocation2 + $0x8] sm:$0xff] %vm47, 0.0
    $region25: #{tpu_custom_call.1} parent=1 // pred_fallthru
      _
    %v50 = vld [vmem:[#allocation2] sm:$0xff]
    %v51 = vld [vmem:[#allocation2 + $0x8] sm:$0xff]
    %v52 = vld [vmem:[#allocation3] sm:$0xff]
    %v53 = vld [vmem:[#allocation3 + $0x8] sm:$0xff]
    %v54 = vld [vmem:[#allocation6] sm:$0xff]
    %v55 = vld [vmem:[#allocation6 + $0x8] sm:$0xff]
    %v56 = vld [vmem:[#allocation6 + $0x10] sm:$0xff]
    %v57 = vld [vmem:[#allocation6 + $0x18] sm:$0xff]
    %vm58 = vcmask 261120
    %v60 = vsel %vm58, %v52, 0
    %v63 = vsel %vm58, %v53, 0
    %65 = vmatprep.subr.mxu0 0.0
    %66 = vmatpush1.msra.mxu0 0.0
    %67 = vmatprep.subr.mxu0 0.0
    %68 = vmatpush1.msra.mxu0 0.0
    %69 = vmatprep.subr.mxu0 0.0
    %70 = vmatpush1.msra.mxu0 0.0
    %71 = vmatprep.subr.mxu0 0.0
    %72 = vmatpush1.msra.mxu0 0.0
    %73 = vmatprep.subr.mxu0 0.0
    %74 = vmatpush1.msra.mxu0 0.0
    %75 = vmatprep.subr.mxu0 0.0
    %76 = vmatpush1.msra.mxu0 0.0
    %77 = vmatprep.subr.mxu0 0.0
    %78 = vmatpush1.msra.mxu0 0.0
    %79 = vmatprep.subr.mxu0 0.0
    %80 = vmatpush1.msra.mxu0 0.0
    %81 = vmatprep.subr.mxu0 0.0
    %82 = vmatpush1.msra.mxu0 0.0
    %83 = vmatprep.subr.mxu0 0.0
    %84 = vmatpush1.msra.mxu0 0.0
    %85 = vmatprep.subr.mxu0 0.0
    %86 = vmatpush1.msra.mxu0 0.0
    %87 = vmatprep.subr.mxu0 0.0
    %88 = vmatpush1.msra.mxu0 0.0
    %89 = vmatprep.subr.mxu0 0.0
    %90 = vmatpush1.msra.mxu0 %v57
    %91 = vmatprep.subr.mxu0 0.0
    %92 = vmatpush1.msra.mxu0 %v56
    %93 = vmatprep.subr.mxu0 0.0
    %94 = vmatpush1.msra.mxu0 %v55
    %95 = vmatprep.subr.mxu0 0.0
    %96 = vmatpush1.msra.mxu0 %v54
    %97 = vmatprep.subr.mxu0 0.0
    %98 = vmatpush2.msra.mxu0 0.0
    %99 = vmatprep.subr.mxu0 0.0
    %100 = vmatpush2.msra.mxu0 0.0
    %101 = vmatprep.subr.mxu0 0.0
    %102 = vmatpush2.msra.mxu0 0.0
    %103 = vmatprep.subr.mxu0 0.0
    %104 = vmatpush2.msra.mxu0 0.0
    %105 = vmatprep.subr.mxu0 0.0
    %106 = vmatpush2.msra.mxu0 0.0
    %107 = vmatprep.subr.mxu0 0.0
    %108 = vmatpush2.msra.mxu0 0.0
    %109 = vmatprep.subr.mxu0 0.0
    %110 = vmatpush2.msra.mxu0 0.0
    %111 = vmatprep.subr.mxu0 0.0
    %112 = vmatpush2.msra.mxu0 0.0
    %113 = vmatprep.subr.mxu0 0.0
    %114 = vmatpush2.msra.mxu0 0.0
    %115 = vmatprep.subr.mxu0 0.0
    %116 = vmatpush2.msra.mxu0 0.0
    %117 = vmatprep.subr.mxu0 0.0
    %118 = vmatpush2.msra.mxu0 0.0
    %119 = vmatprep.subr.mxu0 0.0
    %120 = vmatpush2.msra.mxu0 0.0
    %121 = vmatprep.subr.mxu0 0.0
    %122 = vmatpush2.msra.mxu0 0.0
    %123 = vmatprep.subr.mxu0 0.0
    %124 = vmatpush2.msra.mxu0 0.0
    %125 = vmatprep.subr.mxu0 0.0
    %126 = vmatpush2.msra.mxu0 0.0
    %127 = vmatprep.subr.mxu0 0.0
    %128 = vmatpush2.msra.mxu0 0.0
    %129 = vmatprep.mubr.f32.mxu0 0.0
    %130 = vmatmul.mubr.f32.gmra.mxu0 %v60
    %v131 = vpop.f32.mrf.mxu0
    %v132 = vadd.f32 0.0, %v131
    %v133 = vpop.f32.mrf.mxu0
    %134 = vmatprep.mubr.f32.mxu0 0.0
    %135 = vmatmul.mubr.f32.gmra.mxu0 %v63
    %v136 = vpop.f32.mrf.mxu0
    %v137 = vadd.f32 0.0, %v136
    %v138 = vpop.f32.mrf.mxu0
    %139 = vdwg.mxu0
    %v140 = vadd.f32 %v50, %v132
    %v141 = vadd.f32 %v51, %v137
    %vm142 = vcmask 523264
    %143 = vst.msk [vmem:[#allocation2] sm:$0xff] %vm142, %v140
    %144 = vst.msk [vmem:[#allocation2 + $0x8] sm:$0xff] %vm142, %v141
    // Predicated region
    $region26: #{tpu_custom_call.1} parent=1 // pred_check
      %p145 = pneg %p43
    $region27: #{tpu_custom_call.1} parent=1 // pred_check_branch
      %147 = sbr.rel (%p145) target = $region29
    $region28: #{tpu_custom_call.1} parent=1 // pred_region
      %v148 = vld [vmem:[#allocation2] sm:$0xff]
      %v149 = vld [vmem:[#allocation2 + $0x8] sm:$0xff]
      %v150 = vld [vmem:[%s2] sm:$0x1]
      %v152 = vlaneseq
      %v153 = vshrl.u32 %v152, 7
      %v154 = vsub.s32 0, %v153
      %v155 = vrot.slane %v150, %v154
      %v157 = vadd.f32 %v148, %v155
      %v158 = vadd.f32 %v149, %v155
      %159 = vst.msk [vmem:[#allocation8] sm:$0xff] %vm142, %v157
      %160 = vst.msk [vmem:[#allocation8 + $0x8] sm:$0xff] %vm142, %v158
    $region29: #{tpu_custom_call.1} parent=1 // pred_fallthru
      _
    // Predicated region
    $region30: #{tpu_custom_call.1} parent=1 // pred_check
      _
    $region31: #{tpu_custom_call.1} parent=1 // pred_check_branch
      %162 = sbr.rel (0) target = $region33
    $region32: #{tpu_custom_call.1} parent=1 // pred_region
      %s164 = ssub.s32 256, 256
      %165 = vsyncadd [#allocation5], %s164
      %s166 = sshll.u32 [#allocation8], 4
      %s167 = int_to_ptr.vmem [resolvable:$true] %s166
      %172 = dma.vmem_to_hbm [thread:$0]  %s167, 256, %s3, [#allocation5], 128, 128, 8
    $region33: #{tpu_custom_call.1} parent=1 // pred_fallthru
      _
    // Predicated region
    $region34: #{tpu_custom_call.1} parent=1 // pred_check
      _
    $region35: #{tpu_custom_call.1} parent=1 // pred_check_branch
      %174 = sbr.rel (0) target = $region37
    $region36: #{tpu_custom_call.1} parent=1 // pred_region
      %175 = dma.done [#allocation5], 256
    $region37: #{tpu_custom_call.1} parent=1 // pred_fallthru
      _
    %176 = vsyncpa [#allocation4], 1
    %177 = vsyncpa [#allocation7], 1
    %178 = vsyncpa [#allocation5], 1

</llo_original>
